<compile_context>
chip_gen: v6e
topology: v6e:2x2x1
jax: 0.10.0
libtpu: 0.0.40
codegen_flags: <defaults>
</compile_context>

<pallas_src>
import jax
import jax.numpy as jnp
from jax.experimental import pallas as pl
from jax.experimental.pallas import tpu as pltpu

EPS = 1e-5
LANE = 128


def _round_up(v, m):
    return ((v + m - 1) // m) * m


def linear_bn_kernel(x_ref, wt_ref, gamma_ref, beta_ref, o_ref):
    # Single fused VMEM tile; everything is lane-dense (C padded to 256).
    x = x_ref[...]            # (N, Cp)  f32
    wt = wt_ref[...]          # (Cp, Cp) f32, already laid out (in, out)

    # nn.Linear (bias omitted: cancelled by the BN mean subtraction below).
    y = jnp.dot(x, wt, preferred_element_type=jnp.float32)    # (N, Cp)  MXU

    # nn.BatchNorm1d (training mode): batch stats over axis 0, biased var.
    mean = jnp.mean(y, axis=0, keepdims=True)                  # (1, Cp)  XLU
    diff = y - mean
    var = jnp.mean(diff * diff, axis=0, keepdims=True)         # (1, Cp)

    # Fused affine: one (1, Cp) scale row, then one full-tile multiply-add.
    scale = gamma_ref[...] * jax.lax.rsqrt(var + EPS)          # EUP rsqrt
    o_ref[...] = (diff * scale + beta_ref[...]).astype(o_ref.dtype)


def prepare_params(w, b, gamma, beta):
    """One-time parameter prep ("module init"); NOT in the per-call path.

    w: (out, in) as in nn.Linear.  Returns the weight pre-transposed to
    (in, out) and zero-padded to (Cp, Cp), plus gamma/beta as padded (1, Cp)
    rows.  Padded weight rows/cols are zero, so padded x columns contribute
    nothing and padded output columns are exactly beta_pad = 0.
    """
    del b  # Linear bias is mathematically cancelled by training-mode BN.
    c = w.shape[0]
    cp = _round_up(c, LANE)
    pad = cp - c
    wt_p = jnp.pad(w.T, ((0, pad), (0, pad)))                   # (Cp, Cp)
    g_p = jnp.pad(gamma.reshape(1, c), ((0, 0), (0, pad)))      # (1, Cp)
    be_p = jnp.pad(beta.reshape(1, c), ((0, 0), (0, pad)))      # (1, Cp)
    return wt_p, g_p, be_p


@jax.jit
def linear_bn_forward_padded(x, wt_p, g_p, be_p):
    """x: (N, C) f32 with prepared params -> lane-dense (N, Cp) activation.

    The only per-call prep is the tiny (N, C)->(N, Cp) x pad (~6 KiB here);
    the output stays padded so downstream ops consume it lane-aligned (or
    slice [:, :C] themselves) instead of materializing an extra copy.
    """
    n, c = x.shape
    cp = wt_p.shape[1]
    x_p = jnp.pad(x, ((0, 0), (0, cp - c)))

    vmem = pl.BlockSpec(memory_space=pltpu.MemorySpace.VMEM)
    return pl.pallas_call(
        linear_bn_kernel,
        out_shape=jax.ShapeDtypeStruct((n, cp), jnp.float32),
        in_specs=[vmem] * 4,
        out_specs=vmem,
    )(x_p, wt_p, g_p, be_p)


if __name__ == "__main__":
    inc = 200        # module default
    batch = 8

    key = jax.random.PRNGKey(0)
    kx, kw, kb = jax.random.split(key, 3)

    # Deterministic synthetic parameter init (shapes match nn.Linear(inc, inc)
    # and nn.BatchNorm1d(inc)); not a checkpoint load.
    bound = 1.0 / (inc ** 0.5)
    w = jax.random.uniform(kw, (inc, inc), jnp.float32, -bound, bound)  # (out, in)
    b = jax.random.uniform(kb, (inc,), jnp.float32, -bound, bound)
    gamma = jnp.ones((inc,), jnp.float32)
    beta = jnp.zeros((inc,), jnp.float32)

    x = jax.random.normal(kx, (batch, inc), jnp.float32)

    # One-time prep (module init), outside the jitted per-call path.
    wt_p, g_p, be_p = prepare_params(w, b, gamma, beta)
    wt_p, g_p, be_p = jax.block_until_ready((wt_p, g_p, be_p))

    out_padded = linear_bn_forward_padded(x, wt_p, g_p, be_p)
    out_padded = jax.block_until_ready(out_padded)

    # Slice back to (N, inc) OUTSIDE the jitted forward, for the check only.
    out = out_padded[:, :inc]

    # Lightweight sanity check against pure-JAX reference (bias included in
    # the reference; it cancels under BN so results must still match).
    y_ref = x @ w.T + b
    m = y_ref.mean(axis=0, keepdims=True)
    v = ((y_ref - m) ** 2).mean(axis=0, keepdims=True)
    ref = gamma * (y_ref - m) / jnp.sqrt(v + EPS) + beta
    assert out.shape == (batch, inc), "bad output shape"
    assert jnp.allclose(out, ref, atol=1e-4, rtol=1e-4), "mismatch vs reference"

    print("KERNEL_OK")
</pallas_src>

<mosaic_0001>
module attributes {stable_mosaic.version = 11 : i64} {
  func.func @linear_bn_kernel(%arg0: memref<8x256xf32, #tpu.memory_space<vmem>>, %arg1: memref<256x256xf32, #tpu.memory_space<vmem>>, %arg2: memref<1x256xf32, #tpu.memory_space<vmem>>, %arg3: memref<1x256xf32, #tpu.memory_space<vmem>>, %arg4: memref<8x256xf32, #tpu.memory_space<vmem>>) attributes {dimension_semantics = [], scalar_prefetch = 0 : i64, scratch_operands = 0 : i64, tpu.core_type = #tpu.core_type<tc>} {
    %c0 = arith.constant 0 : index
    %c0_0 = arith.constant 0 : index
    %0 = vector.load %arg0[%c0, %c0_0] : memref<8x256xf32, #tpu.memory_space<vmem>>, vector<8x256xf32>
    %c0_1 = arith.constant 0 : index
    %c0_2 = arith.constant 0 : index
    %1 = vector.load %arg1[%c0_1, %c0_2] : memref<256x256xf32, #tpu.memory_space<vmem>>, vector<256x256xf32>
    %cst = arith.constant dense<0.000000e+00> : vector<8x256xf32>
    %2 = tpu.matmul %0, %1, %cst {dimension_numbers = #tpu.dot_dimension_numbers<[1], [0], [0], [1], [0, 0, 1, 1], [], []>} : vector<8x256xf32>, vector<256x256xf32>, vector<8x256xf32> -> vector<8x256xf32>
    %cst_3 = arith.constant dense<0.000000e+00> : vector<256xf32>
    %3 = vector.multi_reduction <add>, %2, %cst_3 [0] : vector<8x256xf32> to vector<256xf32>
    %4 = vector.shape_cast %3 : vector<256xf32> to vector<1x256xf32>
    %cst_4 = arith.constant 8.000000e+00 : f32
    %5 = vector.broadcast %cst_4 : f32 to vector<1x256xf32>
    %6 = arith.divf %4, %5 : vector<1x256xf32>
    %7 = vector.broadcast %6 : vector<1x256xf32> to vector<8x256xf32>
    %8 = arith.subf %2, %7 : vector<8x256xf32>
    %9 = arith.mulf %8, %8 : vector<8x256xf32>
    %cst_5 = arith.constant dense<0.000000e+00> : vector<256xf32>
    %10 = vector.multi_reduction <add>, %9, %cst_5 [0] : vector<8x256xf32> to vector<256xf32>
    %11 = vector.shape_cast %10 : vector<256xf32> to vector<1x256xf32>
    %cst_6 = arith.constant 8.000000e+00 : f32
    %12 = vector.broadcast %cst_6 : f32 to vector<1x256xf32>
    %13 = arith.divf %11, %12 : vector<1x256xf32>
    %c0_7 = arith.constant 0 : index
    %c0_8 = arith.constant 0 : index
    %14 = vector.load %arg2[%c0_7, %c0_8] : memref<1x256xf32, #tpu.memory_space<vmem>>, vector<1x256xf32>
    %cst_9 = arith.constant 9.99999974E-6 : f32
    %15 = vector.broadcast %cst_9 : f32 to vector<1x256xf32>
    %16 = arith.addf %13, %15 : vector<1x256xf32>
    %17 = math.rsqrt %16 : vector<1x256xf32>
    %18 = arith.mulf %14, %17 : vector<1x256xf32>
    %19 = vector.broadcast %18 : vector<1x256xf32> to vector<8x256xf32>
    %20 = arith.mulf %8, %19 : vector<8x256xf32>
    %c0_10 = arith.constant 0 : index
    %c0_11 = arith.constant 0 : index
    %21 = vector.load %arg3[%c0_10, %c0_11] : memref<1x256xf32, #tpu.memory_space<vmem>>, vector<1x256xf32>
    %22 = vector.broadcast %21 : vector<1x256xf32> to vector<8x256xf32>
    %23 = arith.addf %20, %22 : vector<8x256xf32>
    %c0_12 = arith.constant 0 : index
    %c0_13 = arith.constant 0 : index
    %24 = vector.load %arg4[%c0_12, %c0_13] : memref<8x256xf32, #tpu.memory_space<vmem>>, vector<8x256xf32>
    tpu.vector_store %arg4[%c0_12, %c0_13], %23 {strides = array<i32>} : memref<8x256xf32, #tpu.memory_space<vmem>>, vector<8x256xf32>,
    return
  }
}

</mosaic_0001>

<llo_original>
// kernel: linear_bn_forward_padded.1
$region0: #{linear_bn_forward_padded.1}
  #allocation0 [shape = 'u32[]', space=smem, size = 0x4, offset = 0x4, fixed_abs, tag = 'smem constant byte address 0x4 - core index']
  #allocation1 [shape = 'u32[144,128]{1,0:T(1,128)}', space=vmem, size = 0x12000, scoped, tag = 'internal scratch']
  %s0 = inlined_call_operand.vmem [shape: f32[8,256], index: 0, kind: input, shape index: {}]
  %s1 = inlined_call_operand.hbm [shape: f32[256,256], index: 1, kind: input, shape index: {}]
  %s2 = inlined_call_operand.vmem [shape: f32[1,256], index: 2, kind: input, shape index: {}]
  %s3 = inlined_call_operand.vmem [shape: f32[1,256], index: 3, kind: input, shape index: {}]
  %s4 = inlined_call_operand.hbm [shape: f32[8,256], index: 4, kind: output, shape index: {}]
  %s5 = sld [smem:[#allocation0]]
  $region30: #{linear_bn_forward_padded.1} parent=0
    _
  %s7 = ssub.s32 1, %s5
  %s8 = scalar_select 0, %s7, %s5
  $region1: #{linear_bn_forward_padded.1} parent=0
    #allocation2 [shape = 'u8[262144]{0}', space=vmem, size = 0x40000, scoped, tag = 'input window, operand 1, single buffered']
    #allocation3 [shape = 's32[1]{0}', space=sflag, size = 0x4, scoped, tag = 'scoped memory for linear_bn_forward_padded.1']
    #allocation4 [shape = 's32[1]{0}', space=sflag, size = 0x4, scoped, tag = 'scoped memory for linear_bn_forward_padded.1']
    #allocation5 [shape = 'u8[8192]{0}', space=vmem, size = 0x2000, scoped, tag = 'output window, operand 0, single buffered']
    %9 = vsyncpa [#allocation3], 0
    %10 = vsyncpa [#allocation4], 0
    // Predicated region
    $region2: #{linear_bn_forward_padded.1} parent=1 // pred_check
      _
    $region3: #{linear_bn_forward_padded.1} parent=1 // pred_check_branch
      %12 = sbr.rel (0) target = $region5
    $region4: #{linear_bn_forward_padded.1} parent=1 // pred_region
      _
    $region5: #{linear_bn_forward_padded.1} parent=1 // pred_fallthru
      _
    // Predicated region
    $region6: #{linear_bn_forward_padded.1} parent=1 // pred_check
      _
    $region7: #{linear_bn_forward_padded.1} parent=1 // pred_check_branch
      %14 = sbr.rel (0) target = $region9
    $region8: #{linear_bn_forward_padded.1} parent=1 // pred_region
      %s16 = ssub.s32 8192, 8192
      %17 = vsyncadd [#allocation3], %s16
      %s18 = sshll.u32 [#allocation2], 4
      %s19 = int_to_ptr.vmem [resolvable:$true] %s18
      %24 = dma.hbm_to_vmem [thread:$0]  %s1, 8192, %s19, [#allocation3], 256, 256, 16
    $region9: #{linear_bn_forward_padded.1} parent=1 // pred_fallthru
      _
    // Predicated region
    $region10: #{linear_bn_forward_padded.1} parent=1 // pred_check
      _
    $region11: #{linear_bn_forward_padded.1} parent=1 // pred_check_branch
      %26 = sbr.rel (0) target = $region13
    $region12: #{linear_bn_forward_padded.1} parent=1 // pred_region
      _
    $region13: #{linear_bn_forward_padded.1} parent=1 // pred_fallthru
      _
    // Predicated region
    $region14: #{linear_bn_forward_padded.1} parent=1 // pred_check
      _
    $region15: #{linear_bn_forward_padded.1} parent=1 // pred_check_branch
      %28 = sbr.rel (0) target = $region17
    $region16: #{linear_bn_forward_padded.1} parent=1 // pred_region
      _
    $region17: #{linear_bn_forward_padded.1} parent=1 // pred_fallthru
      _
    // Predicated region
    $region18: #{linear_bn_forward_padded.1} parent=1 // pred_check
      _
    $region19: #{linear_bn_forward_padded.1} parent=1 // pred_check_branch
      %30 = sbr.rel (0) target = $region21
    $region20: #{linear_bn_forward_padded.1} parent=1 // pred_region
      %31 = dma.done [#allocation3], 8192
    $region21: #{linear_bn_forward_padded.1} parent=1 // pred_fallthru
      _
    %v32 = vld [vmem:[%s0] sm:$0xff]
    %v33 = vld [vmem:[%s0 + $0x8] sm:$0xff]
    %v34 = vld [vmem:[#allocation2] sm:$0xff]
    %v35 = vld [vmem:[#allocation2 + $0x8] sm:$0xff]
    %v36 = vld [vmem:[#allocation2 + $0x10] sm:$0xff]
    %v37 = vld [vmem:[#allocation2 + $0x18] sm:$0xff]
    %v38 = vld [vmem:[#allocation2 + $0x20] sm:$0xff]
    %v39 = vld [vmem:[#allocation2 + $0x28] sm:$0xff]
    %v40 = vld [vmem:[#allocation2 + $0x30] sm:$0xff]
    %v41 = vld [vmem:[#allocation2 + $0x38] sm:$0xff]
    %v42 = vld [vmem:[#allocation2 + $0x40] sm:$0xff]
    %v43 = vld [vmem:[#allocation2 + $0x48] sm:$0xff]
    %v44 = vld [vmem:[#allocation2 + $0x50] sm:$0xff]
    %v45 = vld [vmem:[#allocation2 + $0x58] sm:$0xff]
    %v46 = vld [vmem:[#allocation2 + $0x60] sm:$0xff]
    %v47 = vld [vmem:[#allocation2 + $0x68] sm:$0xff]
    %v48 = vld [vmem:[#allocation2 + $0x70] sm:$0xff]
    %v49 = vld [vmem:[#allocation2 + $0x78] sm:$0xff]
    %v50 = vld [vmem:[#allocation2 + $0x80] sm:$0xff]
    %v51 = vld [vmem:[#allocation2 + $0x88] sm:$0xff]
    %v52 = vld [vmem:[#allocation2 + $0x90] sm:$0xff]
    %v53 = vld [vmem:[#allocation2 + $0x98] sm:$0xff]
    %v54 = vld [vmem:[#allocation2 + $0xa0] sm:$0xff]
    %v55 = vld [vmem:[#allocation2 + $0xa8] sm:$0xff]
    %v56 = vld [vmem:[#allocation2 + $0xb0] sm:$0xff]
    %v57 = vld [vmem:[#allocation2 + $0xb8] sm:$0xff]
    %v58 = vld [vmem:[#allocation2 + $0xc0] sm:$0xff]
    %v59 = vld [vmem:[#allocation2 + $0xc8] sm:$0xff]
    %v60 = vld [vmem:[#allocation2 + $0xd0] sm:$0xff]
    %v61 = vld [vmem:[#allocation2 + $0xd8] sm:$0xff]
    %v62 = vld [vmem:[#allocation2 + $0xe0] sm:$0xff]
    %v63 = vld [vmem:[#allocation2 + $0xe8] sm:$0xff]
    %v64 = vld [vmem:[#allocation2 + $0xf0] sm:$0xff]
    %v65 = vld [vmem:[#allocation2 + $0xf8] sm:$0xff]
    %v66 = vld [vmem:[#allocation2 + $0x100] sm:$0xff]
    %v67 = vld [vmem:[#allocation2 + $0x108] sm:$0xff]
    %v68 = vld [vmem:[#allocation2 + $0x110] sm:$0xff]
    %v69 = vld [vmem:[#allocation2 + $0x118] sm:$0xff]
    %v70 = vld [vmem:[#allocation2 + $0x120] sm:$0xff]
    %v71 = vld [vmem:[#allocation2 + $0x128] sm:$0xff]
    %v72 = vld [vmem:[#allocation2 + $0x130] sm:$0xff]
    %v73 = vld [vmem:[#allocation2 + $0x138] sm:$0xff]
    %v74 = vld [vmem:[#allocation2 + $0x140] sm:$0xff]
    %v75 = vld [vmem:[#allocation2 + $0x148] sm:$0xff]
    %v76 = vld [vmem:[#allocation2 + $0x150] sm:$0xff]
    %v77 = vld [vmem:[#allocation2 + $0x158] sm:$0xff]
    %v78 = vld [vmem:[#allocation2 + $0x160] sm:$0xff]
    %v79 = vld [vmem:[#allocation2 + $0x168] sm:$0xff]
    %v80 = vld [vmem:[#allocation2 + $0x170] sm:$0xff]
    %v81 = vld [vmem:[#allocation2 + $0x178] sm:$0xff]
    %v82 = vld [vmem:[#allocation2 + $0x180] sm:$0xff]
    %v83 = vld [vmem:[#allocation2 + $0x188] sm:$0xff]
    %v84 = vld [vmem:[#allocation2 + $0x190] sm:$0xff]
    %v85 = vld [vmem:[#allocation2 + $0x198] sm:$0xff]
    %v86 = vld [vmem:[#allocation2 + $0x1a0] sm:$0xff]
    %v87 = vld [vmem:[#allocation2 + $0x1a8] sm:$0xff]
    %v88 = vld [vmem:[#allocation2 + $0x1b0] sm:$0xff]
    %v89 = vld [vmem:[#allocation2 + $0x1b8] sm:$0xff]
    %v90 = vld [vmem:[#allocation2 + $0x1c0] sm:$0xff]
    %v91 = vld [vmem:[#allocation2 + $0x1c8] sm:$0xff]
    %v92 = vld [vmem:[#allocation2 + $0x1d0] sm:$0xff]
    %v93 = vld [vmem:[#allocation2 + $0x1d8] sm:$0xff]
    %v94 = vld [vmem:[#allocation2 + $0x1e0] sm:$0xff]
    %v95 = vld [vmem:[#allocation2 + $0x1e8] sm:$0xff]
    %v96 = vld [vmem:[#allocation2 + $0x1f0] sm:$0xff]
    %v97 = vld [vmem:[#allocation2 + $0x1f8] sm:$0xff]
    %98 = vmatprep.subr.mxu0 %v65
    %99 = vmatpush1.msra.mxu0 %v64
    %100 = vmatprep.subr.mxu0 %v63
    %101 = vmatpush1.msra.mxu0 %v62
    %102 = vmatprep.subr.mxu0 %v61
    %103 = vmatpush1.msra.mxu0 %v60
    %104 = vmatprep.subr.mxu0 %v59
    %105 = vmatpush1.msra.mxu0 %v58
    %106 = vmatprep.subr.mxu0 %v57
    %107 = vmatpush1.msra.mxu0 %v56
    %108 = vmatprep.subr.mxu0 %v55
    %109 = vmatpush1.msra.mxu0 %v54
    %110 = vmatprep.subr.mxu0 %v53
    %111 = vmatpush1.msra.mxu0 %v52
    %112 = vmatprep.subr.mxu0 %v51
    %113 = vmatpush1.msra.mxu0 %v50
    %114 = vmatprep.subr.mxu0 %v49
    %115 = vmatpush1.msra.mxu0 %v48
    %116 = vmatprep.subr.mxu0 %v47
    %117 = vmatpush1.msra.mxu0 %v46
    %118 = vmatprep.subr.mxu0 %v45
    %119 = vmatpush1.msra.mxu0 %v44
    %120 = vmatprep.subr.mxu0 %v43
    %121 = vmatpush1.msra.mxu0 %v42
    %122 = vmatprep.subr.mxu0 %v41
    %123 = vmatpush1.msra.mxu0 %v40
    %124 = vmatprep.subr.mxu0 %v39
    %125 = vmatpush1.msra.mxu0 %v38
    %126 = vmatprep.subr.mxu0 %v37
    %127 = vmatpush1.msra.mxu0 %v36
    %128 = vmatprep.subr.mxu0 %v35
    %129 = vmatpush1.msra.mxu0 %v34
    %130 = vmatprep.subr.mxu0 %v97
    %131 = vmatpush2.msra.mxu0 %v96
    %132 = vmatprep.subr.mxu0 %v95
    %133 = vmatpush2.msra.mxu0 %v94
    %134 = vmatprep.subr.mxu0 %v93
    %135 = vmatpush2.msra.mxu0 %v92
    %136 = vmatprep.subr.mxu0 %v91
    %137 = vmatpush2.msra.mxu0 %v90
    %138 = vmatprep.subr.mxu0 %v89
    %139 = vmatpush2.msra.mxu0 %v88
    %140 = vmatprep.subr.mxu0 %v87
    %141 = vmatpush2.msra.mxu0 %v86
    %142 = vmatprep.subr.mxu0 %v85
    %143 = vmatpush2.msra.mxu0 %v84
    %144 = vmatprep.subr.mxu0 %v83
    %145 = vmatpush2.msra.mxu0 %v82
    %146 = vmatprep.subr.mxu0 %v81
    %147 = vmatpush2.msra.mxu0 %v80
    %148 = vmatprep.subr.mxu0 %v79
    %149 = vmatpush2.msra.mxu0 %v78
    %150 = vmatprep.subr.mxu0 %v77
    %151 = vmatpush2.msra.mxu0 %v76
    %152 = vmatprep.subr.mxu0 %v75
    %153 = vmatpush2.msra.mxu0 %v74
    %154 = vmatprep.subr.mxu0 %v73
    %155 = vmatpush2.msra.mxu0 %v72
    %156 = vmatprep.subr.mxu0 %v71
    %157 = vmatpush2.msra.mxu0 %v70
    %158 = vmatprep.subr.mxu0 %v69
    %159 = vmatpush2.msra.mxu0 %v68
    %160 = vmatprep.subr.mxu0 %v67
    %161 = vmatpush2.msra.mxu0 %v66
    %162 = vmatprep.mubr.f32.mxu0 %v33
    %163 = vmatmul.mubr.f32.gmra.mxu0 %v32
    %v164 = vpop.f32.mrf.mxu0
    %v165 = vadd.f32 0.0, %v164
    %v166 = vpop.f32.mrf.mxu0
    %v167 = vadd.f32 0.0, %v166
    %168 = vdwg.mxu0
    %v169 = vrot.slane %v165, 4
    %v170 = vadd.f32 %v165, %v169
    %v171 = vrot.slane %v170, 2
    %v172 = vadd.f32 %v170, %v171
    %v173 = vrot.slane %v172, 1
    %v174 = vadd.f32 %v172, %v173
    %v175 = vrot.slane %v167, 4
    %v176 = vadd.f32 %v167, %v175
    %v177 = vrot.slane %v176, 2
    %v178 = vadd.f32 %v176, %v177
    %v179 = vrot.slane %v178, 1
    %v180 = vadd.f32 %v178, %v179
    %v181 = vrcp.pop 8.0
    %v182 = vmul.f32 %v174, %v181
    %v183 = vmul.f32 %v180, %v181
    %v184 = vsub.f32 %v165, %v182
    %v185 = vsub.f32 %v167, %v183
    %v186 = vmul.f32 %v184, %v184
    %v187 = vmul.f32 %v185, %v185
    %v188 = vrot.slane %v186, 4
    %v189 = vadd.f32 %v186, %v188
    %v190 = vrot.slane %v189, 2
    %v191 = vadd.f32 %v189, %v190
    %v192 = vrot.slane %v191, 1
    %v193 = vadd.f32 %v191, %v192
    %v194 = vrot.slane %v187, 4
    %v195 = vadd.f32 %v187, %v194
    %v196 = vrot.slane %v195, 2
    %v197 = vadd.f32 %v195, %v196
    %v198 = vrot.slane %v197, 1
    %v199 = vadd.f32 %v197, %v198
    %v200 = vmul.f32 %v193, %v181
    %v201 = vmul.f32 %v199, %v181
    %v202 = vld [vmem:[%s2] sm:$0x3]
    %v203 = vadd.f32 %v200, 1e-05
    %v204 = vadd.f32 %v201, 1e-05
    %v205 = vrsqrt.pop %v203
    %v206 = vrsqrt.pop %v204
    %v209 = vcombine.low %v205, %v206
    %v211 = vunpack.c.l.s4 1966171168
    %v212 = vunpack.c.0.s8 %v211
    %v213 = vlaneseq
    %v214 = vshrl.u32 %v213, 7
    %v215 = vsub.s32 %v212, %v214
    %v216 = vrot.slane %v209, %v215
    %v218 = vunpack.c.l.s4 1966171168
    %v219 = vunpack.c.0.s8 %v218
    %v220 = vlaneseq
    %v221 = vshrl.u32 %v220, 7
    %v222 = vsub.s32 %v219, %v221
    %v223 = vrot.slane %v216, %v222
    %v225 = vmul.f32 %v202, %v223
    %v227 = vlaneseq
    %v228 = vshrl.u32 %v227, 7
    %v229 = vsub.s32 0, %v228
    %v230 = vrot.slane %v225, %v229
    %v231 = vlaneseq
    %v232 = vshrl.u32 %v231, 7
    %v233 = vsub.s32 1, %v232
    %v234 = vrot.slane %v225, %v233
    %v237 = vmul.f32 %v184, %v230
    %v238 = vmul.f32 %v185, %v234
    %v239 = vld [vmem:[%s3] sm:$0x3]
    %v241 = vlaneseq
    %v242 = vshrl.u32 %v241, 7
    %v243 = vsub.s32 0, %v242
    %v244 = vrot.slane %v239, %v243
    %v245 = vlaneseq
    %v246 = vshrl.u32 %v245, 7
    %v247 = vsub.s32 1, %v246
    %v248 = vrot.slane %v239, %v247
    %v251 = vadd.f32 %v237, %v244
    %v252 = vadd.f32 %v238, %v248
    %253 = vst [vmem:[#allocation5] sm:$0xff] %v251
    %254 = vst [vmem:[#allocation5 + $0x8] sm:$0xff] %v252
    // Predicated region
    $region22: #{linear_bn_forward_padded.1} parent=1 // pred_check
      _
    $region23: #{linear_bn_forward_padded.1} parent=1 // pred_check_branch
      %256 = sbr.rel (0) target = $region25
    $region24: #{linear_bn_forward_padded.1} parent=1 // pred_region
      %s258 = ssub.s32 256, 256
      %259 = vsyncadd [#allocation4], %s258
      %s261 = sshll.u32 [#allocation5], 4
      %s262 = int_to_ptr.vmem [resolvable:$true] %s261
      %264 = dma.vmem_to_hbm [thread:$0]  %s262, 256, %s4, [#allocation4]
    $region25: #{linear_bn_forward_padded.1} parent=1 // pred_fallthru
      _
    // Predicated region
    $region26: #{linear_bn_forward_padded.1} parent=1 // pred_check
      _
    $region27: #{linear_bn_forward_padded.1} parent=1 // pred_check_branch
      %266 = sbr.rel (0) target = $region29
    $region28: #{linear_bn_forward_padded.1} parent=1 // pred_region
      %267 = dma.done [#allocation4], 256
    $region29: #{linear_bn_forward_padded.1} parent=1 // pred_fallthru
      _
    %268 = vsyncpa [#allocation3], 1
    %269 = vsyncpa [#allocation4], 1

</llo_original>
